<compile_context>
chip_gen: v7x
topology: tpu7x:2x2x1
jax: 0.10.0
libtpu: 0.0.40
codegen_flags: <defaults>
</compile_context>

<pallas_src>
import functools
import math

import jax
import jax.numpy as jnp
from jax.experimental import pallas as pl
from jax.experimental.pallas import tpu as pltpu


def _spe_kernel(x_ref, e_ref, p_ref, o_ref, *, rep):
    # x_ref: (block_rows, rep)    rep consecutive timesteps per packed output row
    # e_ref: (rep, lanes)         masked expansion matrix: row g carries
    #                             scale*w_full on its own dim-wide lane group,
    #                             zeros elsewhere (resident VMEM constant)
    # p_ref: (1, lanes)           phase row: 0 for the sin half, pi/2 for the cos
    #                             half, tiled rep times (resident VMEM constant)
    # o_ref: (block_rows, lanes)  lane-dense packed embeddings
    x = x_ref[...]
    # Unrolled broadcast-MAC (rep <= 4 in practice): arg[r, l] =
    #   x[r, l // dim] * scale * w_full[l % dim]
    arg = x[:, 0:1] * e_ref[0:1, :]
    for g in range(1, rep):
        arg = arg + x[:, g:g + 1] * e_ref[g:g + 1, :]
    o_ref[...] = jnp.sin(arg + p_ref[...])


def spe_forward(x, dim=128, max_positions=10000, scale=32, max_block_rows=1024):
    """Pallas implementation of SPE.forward.  Accepts any-shaped x, returns (N, dim) f32."""
    assert dim % 2 == 0, "SPE dim must be even"
    x_flat = jnp.reshape(x, (-1,)).astype(jnp.float32)
    n = x_flat.shape[0]

    # Lane-dense packing factor: rep consecutive timesteps share a 128-lane row.
    rep = 128 // dim if (dim <= 128 and 128 % dim == 0) else 1
    lanes = rep * dim

    # --- constants hoisted out of the kernel (computed once by XLA) -------------
    half = dim // 2
    freqs = jnp.arange(half, dtype=jnp.float32)
    w = (1.0 / max_positions) ** (2.0 * freqs / dim)                     # (half,)
    w_full = jnp.concatenate([w, w])                                     # (dim,)
    phase_full = jnp.concatenate(
        [jnp.zeros((half,), jnp.float32),
         jnp.full((half,), math.pi / 2, dtype=jnp.float32)])             # (dim,)
    # E[g, g2*dim + j] = scale * w_full[j] if g2 == g else 0
    eye = jnp.eye(rep, dtype=jnp.float32)
    e_mat = (eye[:, :, None] * (scale * w_full)[None, None, :]).reshape(rep, lanes)
    phase = jnp.tile(phase_full, rep)[None, :]                           # (1, lanes)

    # --- tiling -----------------------------------------------------------------
    rows = pl.cdiv(n, rep)                       # packed output rows needed
    rows8 = pl.cdiv(rows, 8) * 8                 # sublane multiple
    block_rows = min(max_block_rows, rows8)      # large tiles; multiple of 8
    n_rows = pl.cdiv(rows8, block_rows) * block_rows
    n_pad = n_rows * rep

    if n_pad != n:
        x_flat = jnp.pad(x_flat, (0, n_pad - n))
    x2d = x_flat.reshape(n_rows, rep)            # contiguous view, no data movement

    kernel = functools.partial(_spe_kernel, rep=rep)

    out_packed = pl.pallas_call(
        kernel,
        out_shape=jax.ShapeDtypeStruct((n_rows, lanes), jnp.float32),
        grid_spec=pltpu.PrefetchScalarGridSpec(
            num_scalar_prefetch=0,
            grid=(n_rows // block_rows,),
            in_specs=[
                pl.BlockSpec((block_rows, rep), lambda i: (i, 0)),   # timesteps
                pl.BlockSpec((rep, lanes), lambda i: (0, 0)),        # resident freqs
                pl.BlockSpec((1, lanes), lambda i: (0, 0)),          # resident phase
            ],
            out_specs=pl.BlockSpec((block_rows, lanes), lambda i: (i, 0)),
        ),
        compiler_params=pltpu.CompilerParams(
            dimension_semantics=("parallel",),
        ),
    )(x2d, e_mat, phase)

    # Contiguous reshape back to (N, dim); padded rows are dropped.
    return out_packed.reshape(n_rows * rep, dim)[:n]


def spe_reference(x, dim=128, max_positions=10000, scale=32):
    """Pure-JAX reference mirroring the PyTorch forward exactly."""
    x = jnp.reshape(x, (-1,)).astype(jnp.float32) * scale
    freqs = jnp.arange(dim // 2, dtype=jnp.float32)
    w = (1.0 / max_positions) ** (2.0 * freqs / dim)
    arg = x[:, None] * w[None, :]
    return jnp.concatenate([jnp.sin(arg), jnp.cos(arg)], axis=-1)


if __name__ == "__main__":
    key = jax.random.PRNGKey(0)
    # Small shapes consistent with the module: UNET1D uses SPE(time_channels=64)
    # by default; also exercise the dim=32 lane-packed path (rep=4, ragged N)
    # and the dim=128 full-lane path (rep=1).
    cases = [(8, 64), (37, 32), (8, 128)]
    for batch, dim in cases:
        key, sub = jax.random.split(key)
        t = jax.random.uniform(sub, (batch,), dtype=jnp.float32, minval=0.0, maxval=1.0)

        out = spe_forward(t, dim=dim, max_positions=10000, scale=32)
        out = jax.block_until_ready(out)

        ref = spe_reference(t, dim=dim, max_positions=10000, scale=32)
        assert out.shape == (batch, dim), (out.shape, batch, dim)
        assert jnp.allclose(out, ref, atol=2e-5, rtol=2e-5), f"mismatch vs reference (dim={dim})"

    print("KERNEL_OK")
</pallas_src>

<mosaic_0001>
module attributes {stable_mosaic.version = 11 : i64} {
  func.func @_spe_kernel(%arg0: i32, %arg1: memref<8x2xf32, #tpu.memory_space<vmem>>, %arg2: memref<2x128xf32, #tpu.memory_space<vmem>>, %arg3: memref<1x128xf32, #tpu.memory_space<vmem>>, %arg4: memref<8x128xf32, #tpu.memory_space<vmem>>) attributes {dimension_semantics = [#tpu.dimension_semantics<parallel>], iteration_bounds = array<i64: 1>, scalar_prefetch = 0 : i64, scratch_operands = 0 : i64, tpu.core_type = #tpu.core_type<tc>, window_params = [{transform_indices = @transform_0, window_bounds = array<i64: 8, 2>}, {pipeline_mode = #tpu.pipeline_mode<synchronous>, transform_indices = @transform_1, window_bounds = array<i64: 2, 128>}, {pipeline_mode = #tpu.pipeline_mode<synchronous>, transform_indices = @transform_2, window_bounds = array<i64: 1, 128>}, {transform_indices = @transform_3, window_bounds = array<i64: 8, 128>}]} {
    %c0 = arith.constant 0 : index
    %c0_0 = arith.constant 0 : index
    %0 = vector.load %arg1[%c0, %c0_0] : memref<8x2xf32, #tpu.memory_space<vmem>>, vector<8x2xf32>
    %1 = vector.extract_strided_slice %0 {offsets = [0, 0], sizes = [8, 1], strides = [1, 1]} : vector<8x2xf32> to vector<8x1xf32>
    %c0_1 = arith.constant 0 : index
    %c0_2 = arith.constant 0 : index
    %2 = vector.load %arg2[%c0_1, %c0_2] : memref<2x128xf32, #tpu.memory_space<vmem>>, vector<1x128xf32>
    %3 = vector.broadcast %1 : vector<8x1xf32> to vector<8x128xf32>
    %4 = vector.broadcast %2 : vector<1x128xf32> to vector<8x128xf32>
    %5 = arith.mulf %3, %4 : vector<8x128xf32>
    %6 = vector.extract_strided_slice %0 {offsets = [0, 1], sizes = [8, 1], strides = [1, 1]} : vector<8x2xf32> to vector<8x1xf32>
    %c1 = arith.constant 1 : index
    %c0_3 = arith.constant 0 : index
    %7 = vector.load %arg2[%c1, %c0_3] : memref<2x128xf32, #tpu.memory_space<vmem>>, vector<1x128xf32>
    %8 = vector.broadcast %6 : vector<8x1xf32> to vector<8x128xf32>
    %9 = vector.broadcast %7 : vector<1x128xf32> to vector<8x128xf32>
    %10 = arith.mulf %8, %9 : vector<8x128xf32>
    %11 = arith.addf %5, %10 : vector<8x128xf32>
    %c0_4 = arith.constant 0 : index
    %c0_5 = arith.constant 0 : index
    %12 = vector.load %arg3[%c0_4, %c0_5] : memref<1x128xf32, #tpu.memory_space<vmem>>, vector<1x128xf32>
    %13 = vector.broadcast %12 : vector<1x128xf32> to vector<8x128xf32>
    %14 = arith.addf %11, %13 : vector<8x128xf32>
    %15 = math.sin %14 : vector<8x128xf32>
    %c0_6 = arith.constant 0 : index
    %c0_7 = arith.constant 0 : index
    %16 = vector.load %arg4[%c0_6, %c0_7] : memref<8x128xf32, #tpu.memory_space<vmem>>, vector<8x128xf32>
    tpu.vector_store %arg4[%c0_6, %c0_7], %15 {strides = array<i32>} : memref<8x128xf32, #tpu.memory_space<vmem>>, vector<8x128xf32>,
    return
  }
  func.func @transform_0(%arg0: i32) -> (i32, i32) {
    %c0_i32 = arith.constant 0 : i32
    %c0_i32_0 = arith.constant 0 : i32
    return %arg0, %c0_i32 : i32, i32
  }
  func.func @transform_1(%arg0: i32) -> (i32, i32) {
    %c0_i32 = arith.constant 0 : i32
    %c0_i32_0 = arith.constant 0 : i32
    %c0_i32_1 = arith.constant 0 : i32
    return %c0_i32, %c0_i32_0 : i32, i32
  }
  func.func @transform_2(%arg0: i32) -> (i32, i32) {
    %c0_i32 = arith.constant 0 : i32
    %c0_i32_0 = arith.constant 0 : i32
    %c0_i32_1 = arith.constant 0 : i32
    return %c0_i32, %c0_i32_0 : i32, i32
  }
  func.func @transform_3(%arg0: i32) -> (i32, i32) {
    %c0_i32 = arith.constant 0 : i32
    %c0_i32_0 = arith.constant 0 : i32
    return %arg0, %c0_i32 : i32, i32
  }
}

</mosaic_0001>

<llo_original>
// kernel: tpu_custom_call.1
$region0: #{tpu_custom_call.1}
  #allocation0 [shape = 'u32[]', space=smem, size = 0x4, offset = 0x4, fixed_abs, tag = 'smem constant byte address 0x4 - core index']
  #allocation1 [shape = 'u32[144,128]{1,0:T(1,128)}', space=vmem, size = 0x12000, scoped, tag = 'internal scratch']
  %s0 = inlined_call_operand.vmem [shape: f32[8,2], index: 0, kind: input, shape index: {}]
  %s1 = inlined_call_operand.vmem [shape: f32[2,128], index: 1, kind: input, shape index: {}]
  %s2 = inlined_call_operand.vmem [shape: f32[1,128], index: 2, kind: input, shape index: {}]
  %s3 = inlined_call_operand.hbm [shape: f32[8,128], index: 3, kind: output, shape index: {}]
  %s4 = sld [smem:[#allocation0]]
  $region22: #{tpu_custom_call.1} parent=0
    _
  %s6 = ssub.s32 1, %s4
  %s7 = scalar_select 0, %s6, %s4
  $region1: #{tpu_custom_call.1} parent=0
    #allocation2 [shape = 'u8[4096]{0}', space=vmem, size = 0x1000, scoped, tag = 'output window, operand 0, single buffered']
    #allocation3 [shape = 's32[1]{0}', space=sflag, size = 0x4, scoped, tag = 'scoped memory for tpu_custom_call.1']
    %8 = vsyncpa [#allocation3], 0
    // Predicated region
    $region2: #{tpu_custom_call.1} parent=1 // pred_check
      _
    $region3: #{tpu_custom_call.1} parent=1 // pred_check_branch
      %10 = sbr.rel (0) target = $region5
    $region4: #{tpu_custom_call.1} parent=1 // pred_region
      _
    $region5: #{tpu_custom_call.1} parent=1 // pred_fallthru
      _
    // Predicated region
    $region6: #{tpu_custom_call.1} parent=1 // pred_check
      _
    $region7: #{tpu_custom_call.1} parent=1 // pred_check_branch
      %12 = sbr.rel (0) target = $region9
    $region8: #{tpu_custom_call.1} parent=1 // pred_region
      _
    $region9: #{tpu_custom_call.1} parent=1 // pred_fallthru
      _
    // Predicated region
    $region10: #{tpu_custom_call.1} parent=1 // pred_check
      _
    $region11: #{tpu_custom_call.1} parent=1 // pred_check_branch
      %14 = sbr.rel (0) target = $region13
    $region12: #{tpu_custom_call.1} parent=1 // pred_region
      _
    $region13: #{tpu_custom_call.1} parent=1 // pred_fallthru
      _
    %v15 = vld [vmem:[%s0] sm:$0xff]
    %v16 = vld [vmem:[%s1] sm:$0x1]
    %18 = vset.pattern.permute.xlu0 0
    %19 = vperm.xlu0 %18, %v15
    %v20 = vpop.permute.xlu0 %19
    %v22 = vlaneseq
    %v23 = vshrl.u32 %v22, 7
    %v24 = vsub.s32 0, %v23
    %v25 = vrot.slane %v16, %v24
    %v26 = vmul.f32 %v20, %v25
    %v27 = vld [vmem:[%s1 + $0x1] sm:$0x1]
    %28 = vset.pattern.permute.xlu0 1
    %29 = vperm.xlu0 %28, %v15
    %v30 = vpop.permute.xlu0 %29
    %v32 = vlaneseq
    %v33 = vshrl.u32 %v32, 7
    %v34 = vsub.s32 0, %v33
    %v35 = vrot.slane %v27, %v34
    %v36 = vmul.f32 %v30, %v35
    %v37 = vadd.f32 %v26, %v36
    %v38 = vld [vmem:[%s2] sm:$0x1]
    %v40 = vlaneseq
    %v41 = vshrl.u32 %v40, 7
    %v42 = vsub.s32 0, %v41
    %v43 = vrot.slane %v38, %v42
    %v45 = vadd.f32 %v37, %v43
    %v46 = vand.u32 2147483647, %v45
    %vm47 = vcmp.le.f32.partialorder %v46, 0.7853982
    %vm48 = vcmp.lt.s32.totalorder %v45, 0
    %v49 = vand.u32 %v45, 2139095040
    %v50 = vshrl.u32 %v49, 23
    %v51 = vsub.s32 %v50, 127
    %v52 = vand.u32 2147483647, %v45
    %v53 = vand.u32 %v52, 8388607
    %v54 = vor.u32 %v53, 8388608
    %v55 = vsub.s32 0, %v54
    %v56 = vadd.s32 %v51, 1
    %vm57 = vcmp.gt.s32.totalorder %v56, 0
    %v58 = vsel %vm57, %v56, 0
    %v59 = vshrl.u32 %v58, 5
    %v60 = vand.u32 %v58, 31
    %v61 = vsub.s32 32, %v60
    %v62 = vshrl.u32 683565275, %v61
    %v63 = vshll.u32 683565275, %v60
    %v64 = vshrl.u32 2475754826, %v61
    %v65 = vor.u32 %v63, %v64
    %v66 = vshll.u32 2475754826, %v60
    %v67 = vshrl.u32 2131351028, %v61
    %v68 = vor.u32 %v66, %v67
    %v69 = vshll.u32 2131351028, %v60
    %v70 = vshrl.u32 2102212464, %v61
    %v71 = vor.u32 %v69, %v70
    %v72 = vshll.u32 2102212464, %v60
    %v73 = vshrl.u32 920167782, %v61
    %v74 = vor.u32 %v72, %v73
    %v75 = vshll.u32 920167782, %v60
    %v76 = vshrl.u32 1326507024, %v61
    %v77 = vor.u32 %v75, %v76
    %vm78 = vcmp.lt.s32.totalorder %v59, 1
    %vm79 = vcmp.lt.s32.totalorder %v59, 2
    %vm80 = vcmp.lt.s32.totalorder %v59, 3
    %vm81 = vcmp.lt.s32.totalorder %v59, 4
    %v82 = vsel %vm78, %v62, %v65
    %v83 = vsel %vm81, %v71, 2102212464
    %v84 = vsel %vm80, %v68, %v83
    %v85 = vsel %vm79, %v82, %v84
    %v86 = vsel %vm78, %v65, %v68
    %v87 = vsel %vm81, %v74, 920167782
    %v88 = vsel %vm80, %v71, %v87
    %v89 = vsel %vm79, %v86, %v88
    %v90 = vsel %vm78, %v68, %v71
    %v91 = vsel %vm81, %v77, 1326507024
    %v92 = vsel %vm80, %v74, %v91
    %v93 = vsel %vm79, %v90, %v92
    %v94 = vshll.u32 %v54, 8
    %v95 = vmul.u32.u64.compose %v94, %v93
    %v96 = vextract.low.u32 %v95
    %v97 = vextract.high.u32 %v95
    %v98 = vmul.u32.u64.compose %v94, %v89
    %v99 = vextract.low.u32 %v98
    %v100 = vextract.high.u32 %v98
    %v101 = vmul.u32 %v94, %v85
    %v102 = vadd.s32 %v97, %v99
    %vm103 = vc.u32 %v97, %v99
    %v104 = vadd.s32 %v100, 1
    %v105 = vsel %vm103, %v104, %v100
    %v106 = vadd.s32 %v101, %v105
    %v107 = vadd.s32 %v106, 536870912
    %v108 = vshrl.u32 %v107, 30
    %v109 = vshll.u32 %v108, 30
    %v110 = vsub.s32 %v106, %v109
    %vm111 = vcmp.lt.s32.totalorder %v110, 0
    %v112 = vsub.s32 0, %v110
    %v113 = vsel %vm111, %v112, %v110
    %v114 = vclz %v113
    %v115 = vsub.s32 %v114, 2
    %vm116 = vcmp.gt.s32.totalorder 0, %v115
    %v117 = vsel %vm116, 0, %v115
    %v118 = vsub.s32 32, %v117
    %v119 = vshll.u32 %v110, %v117
    %v120 = vshrl.u32 %v102, %v118
    %v121 = vor.u32 %v119, %v120
    %v122 = vsub.s32 4294967266, %v117
    %v123 = vadd.s32 %v122, 127
    %v124 = vshll.u32 %v123, 23
    %v125 = vor.u32 4788187, %v124
    %v126 = vand.u32 2147483647, %v125
    %v128 = vcvt.s32.f32 %v121
    %v129 = vmul.f32 %v128, %v126
    %v130 = vxor.u32 %v129, 2147483648
    %v131 = vsel %vm48, %v130, %v129
    %v132 = vsub.s32 4, %v108
    %v133 = vsel %vm48, %v132, %v108
    %v134 = vsel %vm47, %v45, %v131
    %v135 = vsel %vm47, 0, %v133
    %v136 = vcosq.f32.pop %v134
    %v137 = vsinq.f32.pop %v134
    %vm138 = vweird.f32 %v45
    %v139 = vadd.s32 %v135, 3
    %v140 = vand.u32 %v139, 3
    %vm141 = vcmp.lt.s32.totalorder %v140, 2
    %vm142 = vcmp.eq.s32.totalorder %v140, 0
    %v143 = vxor.u32 %v137, 2147483648
    %v144 = vsel %vm142, %v136, %v143
    %vm145 = vcmp.eq.s32.totalorder %v140, 2
    %v146 = vxor.u32 %v136, 2147483648
    %v147 = vsel %vm145, %v146, %v137
    %v148 = vsel %vm141, %v144, %v147
    %v149 = vsel %vm138, nan, %v148
    %150 = vst [vmem:[#allocation2] sm:$0xff] %v149
    // Predicated region
    $region14: #{tpu_custom_call.1} parent=1 // pred_check
      _
    $region15: #{tpu_custom_call.1} parent=1 // pred_check_branch
      %152 = sbr.rel (0) target = $region17
    $region16: #{tpu_custom_call.1} parent=1 // pred_region
      %s154 = ssub.s32 128, 128
      %155 = vsyncadd [#allocation3], %s154
      %s157 = sshll.u32 [#allocation2], 4
      %s158 = int_to_ptr.vmem [resolvable:$true] %s157
      %160 = dma.vmem_to_hbm [thread:$0]  %s158, 128, %s3, [#allocation3]
    $region17: #{tpu_custom_call.1} parent=1 // pred_fallthru
      _
    // Predicated region
    $region18: #{tpu_custom_call.1} parent=1 // pred_check
      _
    $region19: #{tpu_custom_call.1} parent=1 // pred_check_branch
      %162 = sbr.rel (0) target = $region21
    $region20: #{tpu_custom_call.1} parent=1 // pred_region
      %163 = dma.done [#allocation3], 128
    $region21: #{tpu_custom_call.1} parent=1 // pred_fallthru
      _
    %164 = vsyncpa [#allocation3], 1

</llo_original>
